<compile_context>
chip_gen: v7x
topology: tpu7x:2x2x1
jax: 0.10.0
libtpu: 0.0.40
codegen_flags: <defaults>
</compile_context>

<pallas_src>
import functools

import jax
import jax.numpy as jnp
from jax.experimental import pallas as pl
from jax.experimental.pallas import tpu as pltpu


def _round_up(n: int, m: int) -> int:
    return ((n + m - 1) // m) * m


def mlp_kernel(x_ref, w1_ref, b1_ref, w2_ref, b2_ref, w3_ref, b3_ref, o_ref):
    # x_ref:  (TB, in_size)              streamed per grid step
    # w1_ref: (in_size, 64), b1: (1,64)  VMEM-resident (constant index_map)
    # w2_ref: (64, 32),      b2: (1,32)  VMEM-resident
    # w3_ref: (1, 32) row vector         VMEM-resident
    # b3_ref: (1,)  scalar in SMEM
    # o_ref:  (1, TB//128, 128)          lane-dense output block

    # Layer 1: (TB, in) @ (in, 64) + b1, ReLU  (MXU, f32 accumulation).
    h1 = jnp.dot(x_ref[...], w1_ref[...], preferred_element_type=jnp.float32)
    h1 = jnp.maximum(h1 + b1_ref[...], 0.0)
    # Layer 2: (TB, 64) @ (64, 32) + b2, ReLU.
    h2 = jnp.dot(h1, w2_ref[...], preferred_element_type=jnp.float32)
    h2 = jnp.maximum(h2 + b2_ref[...], 0.0)
    # Layer 3 (out_features == 1): VPU multiply + cross-lane reduce instead of
    # an N=1 MXU matmul (which would use 1 of 128/256 MXU output lanes).
    out = jnp.sum(h2 * w3_ref[...], axis=-1) + b3_ref[0]          # (TB,)
    # Lane-dense store: batch lands on the lane axis of the output block.
    o_ref[...] = out.reshape(o_ref.shape).astype(o_ref.dtype)


@functools.partial(jax.jit, static_argnames=("tile_batch",))
def mlp_forward(x, params, *, tile_batch=512):
    """Fused MLP forward: x of shape (..., in_size) -> (..., 1)."""
    w1, b1, w2, b2, w3, b3 = params
    in_size = x.shape[-1]
    lead = x.shape[:-1]

    x2 = x.reshape(-1, in_size).astype(jnp.float32)
    B = x2.shape[0]

    # Batch tile: multiple of 128 so the output block is lane-dense; capped by
    # the (padded) batch so small batches run as a single grid step.
    # At in_size<=O(1k) even TB=512 is far under the v7x 64 MiB VMEM budget.
    tb = max(128, _round_up(tile_batch, 128))
    TB = min(tb, _round_up(B, 128))
    B_pad = _round_up(B, TB)
    num_tiles = B_pad // TB
    k = TB // 128

    if B_pad != B:
        x2 = jnp.pad(x2, ((0, B_pad - B), (0, 0)))   # zero rows; sliced off below

    def resident(a):  # full-array block, constant index_map -> stays in VMEM
        return pl.BlockSpec(a.shape, lambda i, _nd=a.ndim: (0,) * _nd)

    out_blocks = pl.pallas_call(
        mlp_kernel,
        out_shape=jax.ShapeDtypeStruct((num_tiles, k, 128), jnp.float32),
        grid=(num_tiles,),
        in_specs=[
            pl.BlockSpec((TB, in_size), lambda i: (i, 0)),        # x: streamed
            resident(w1), resident(b1),
            resident(w2), resident(b2),
            resident(w3),
            pl.BlockSpec(memory_space=pltpu.MemorySpace.SMEM),    # b3 scalar
        ],
        out_specs=pl.BlockSpec((1, k, 128), lambda i: (i, 0, 0)),
        compiler_params=pltpu.CompilerParams(
            dimension_semantics=("parallel",),
        ),
    )(x2, w1, b1, w2, b2, w3, b3)

    return out_blocks.reshape(B_pad)[:B].reshape(*lead, 1)


def init_params(key, in_size):
    """Deterministic init mimicking torch.nn.Linear (uniform +/- 1/sqrt(fan_in))."""
    ks = jax.random.split(key, 6)

    def linear(kw, kb, fan_in, fan_out):
        bound = 1.0 / jnp.sqrt(jnp.float32(fan_in))
        w = jax.random.uniform(kw, (fan_in, fan_out), jnp.float32, -bound, bound)
        b = jax.random.uniform(kb, (1, fan_out), jnp.float32, -bound, bound)
        return w, b

    w1, b1 = linear(ks[0], ks[1], in_size, 64)
    w2, b2 = linear(ks[2], ks[3], 64, 32)
    w3, b3 = linear(ks[4], ks[5], 32, 1)
    # Layer-3 weight kept as a (1, 32) row vector (used in the VPU reduce),
    # its bias as a (1,) SMEM scalar.
    return (w1, b1, w2, b2, w3.reshape(1, 32), b3.reshape(1))


def reference_mlp(x, params):
    w1, b1, w2, b2, w3_row, b3 = params
    h1 = jnp.maximum(x @ w1 + b1, 0.0)
    h2 = jnp.maximum(h1 @ w2 + b2, 0.0)
    # Layer 3 evaluated elementwise (mathematically h2 @ W3.T + b3).
    return jnp.sum(h2 * w3_row, axis=-1, keepdims=True) + b3


if __name__ == "__main__":
    key = jax.random.PRNGKey(0)
    k_x, k_p = jax.random.split(key)

    # Shapes consistent with the module's script: x ~ (3, 5, 7), Linear over
    # the last axis (in_size = 7).
    in_size = 7
    x = jax.random.normal(k_x, (3, 5, in_size), dtype=jnp.float32)
    params = init_params(k_p, in_size)

    out = jax.block_until_ready(mlp_forward(x, params))
    ref = reference_mlp(x, params)

    assert out.shape == (3, 5, 1), out.shape
    assert jnp.allclose(out, ref, atol=1e-4, rtol=1e-4), (out, ref)

    print("KERNEL_OK")
</pallas_src>

<mosaic_0001>
module attributes {stable_mosaic.version = 11 : i64} {
  func.func @mlp_kernel(%arg0: i32, %arg1: memref<128x7xf32, #tpu.memory_space<vmem>>, %arg2: memref<7x64xf32, #tpu.memory_space<vmem>>, %arg3: memref<1x64xf32, #tpu.memory_space<vmem>>, %arg4: memref<64x32xf32, #tpu.memory_space<vmem>>, %arg5: memref<1x32xf32, #tpu.memory_space<vmem>>, %arg6: memref<1x32xf32, #tpu.memory_space<vmem>>, %arg7: memref<1xf32, #tpu.memory_space<smem>>, %arg8: memref<1x1x128xf32, #tpu.memory_space<vmem>>) attributes {dimension_semantics = [#tpu.dimension_semantics<parallel>], iteration_bounds = array<i64: 1>, scalar_prefetch = 0 : i64, scratch_operands = 0 : i64, tpu.core_type = #tpu.core_type<tc>, window_params = [{transform_indices = @transform_0, window_bounds = array<i64: 128, 7>}, {pipeline_mode = #tpu.pipeline_mode<synchronous>, transform_indices = @transform_1, window_bounds = array<i64: 7, 64>}, {pipeline_mode = #tpu.pipeline_mode<synchronous>, transform_indices = @transform_2, window_bounds = array<i64: 1, 64>}, {pipeline_mode = #tpu.pipeline_mode<synchronous>, transform_indices = @transform_3, window_bounds = array<i64: 64, 32>}, {pipeline_mode = #tpu.pipeline_mode<synchronous>, transform_indices = @transform_4, window_bounds = array<i64: 1, 32>}, {pipeline_mode = #tpu.pipeline_mode<synchronous>, transform_indices = @transform_5, window_bounds = array<i64: 1, 32>}, {transform_indices = @transform_6, window_bounds = array<i64: 1>}, {transform_indices = @transform_7, window_bounds = array<i64: 1, 1, 128>}]} {
    %c0 = arith.constant 0 : index
    %c0_0 = arith.constant 0 : index
    %0 = vector.load %arg1[%c0, %c0_0] : memref<128x7xf32, #tpu.memory_space<vmem>>, vector<128x7xf32>
    %c0_1 = arith.constant 0 : index
    %c0_2 = arith.constant 0 : index
    %1 = vector.load %arg2[%c0_1, %c0_2] : memref<7x64xf32, #tpu.memory_space<vmem>>, vector<7x64xf32>
    %cst = arith.constant dense<0.000000e+00> : vector<128x64xf32>
    %2 = tpu.matmul %0, %1, %cst {dimension_numbers = #tpu.dot_dimension_numbers<[1], [0], [0], [1], [0, 0, 1, 1], [], []>} : vector<128x7xf32>, vector<7x64xf32>, vector<128x64xf32> -> vector<128x64xf32>
    %c0_3 = arith.constant 0 : index
    %c0_4 = arith.constant 0 : index
    %3 = vector.load %arg3[%c0_3, %c0_4] : memref<1x64xf32, #tpu.memory_space<vmem>>, vector<1x64xf32>
    %4 = vector.broadcast %3 : vector<1x64xf32> to vector<128x64xf32>
    %5 = arith.addf %2, %4 : vector<128x64xf32>
    %cst_5 = arith.constant 0.000000e+00 : f32
    %6 = vector.broadcast %cst_5 : f32 to vector<128x64xf32>
    %7 = arith.maximumf %5, %6 : vector<128x64xf32>
    %c0_6 = arith.constant 0 : index
    %c0_7 = arith.constant 0 : index
    %8 = vector.load %arg4[%c0_6, %c0_7] : memref<64x32xf32, #tpu.memory_space<vmem>>, vector<64x32xf32>
    %cst_8 = arith.constant dense<0.000000e+00> : vector<128x32xf32>
    %9 = tpu.matmul %7, %8, %cst_8 {dimension_numbers = #tpu.dot_dimension_numbers<[1], [0], [0], [1], [0, 0, 1, 1], [], []>} : vector<128x64xf32>, vector<64x32xf32>, vector<128x32xf32> -> vector<128x32xf32>
    %c0_9 = arith.constant 0 : index
    %c0_10 = arith.constant 0 : index
    %10 = vector.load %arg5[%c0_9, %c0_10] : memref<1x32xf32, #tpu.memory_space<vmem>>, vector<1x32xf32>
    %11 = vector.broadcast %10 : vector<1x32xf32> to vector<128x32xf32>
    %12 = arith.addf %9, %11 : vector<128x32xf32>
    %cst_11 = arith.constant 0.000000e+00 : f32
    %13 = vector.broadcast %cst_11 : f32 to vector<128x32xf32>
    %14 = arith.maximumf %12, %13 : vector<128x32xf32>
    %c0_12 = arith.constant 0 : index
    %c0_13 = arith.constant 0 : index
    %15 = vector.load %arg6[%c0_12, %c0_13] : memref<1x32xf32, #tpu.memory_space<vmem>>, vector<1x32xf32>
    %16 = vector.broadcast %15 : vector<1x32xf32> to vector<128x32xf32>
    %17 = arith.mulf %14, %16 : vector<128x32xf32>
    %cst_14 = arith.constant dense<0.000000e+00> : vector<128xf32>
    %18 = vector.multi_reduction <add>, %17, %cst_14 [1] : vector<128x32xf32> to vector<128xf32>
    %c0_15 = arith.constant 0 : index
    %19 = memref.load %arg7[%c0_15] : memref<1xf32, #tpu.memory_space<smem>>
    %20 = vector.broadcast %19 : f32 to vector<128xf32>
    %21 = arith.addf %18, %20 : vector<128xf32>
    %22 = vector.shape_cast %21 : vector<128xf32> to vector<1x1x128xf32>
    %c0_16 = arith.constant 0 : index
    %c0_17 = arith.constant 0 : index
    %c0_18 = arith.constant 0 : index
    %23 = vector.load %arg8[%c0_16, %c0_17, %c0_18] : memref<1x1x128xf32, #tpu.memory_space<vmem>>, vector<1x1x128xf32>
    tpu.vector_store %arg8[%c0_16, %c0_17, %c0_18], %22 {strides = array<i32>} : memref<1x1x128xf32, #tpu.memory_space<vmem>>, vector<1x1x128xf32>,
    return
  }
  func.func @transform_0(%arg0: i32) -> (i32, i32) {
    %c0_i32 = arith.constant 0 : i32
    %c0_i32_0 = arith.constant 0 : i32
    return %arg0, %c0_i32 : i32, i32
  }
  func.func @transform_1(%arg0: i32) -> (i32, i32) {
    %c0_i32 = arith.constant 0 : i32
    %c0_i32_0 = arith.constant 0 : i32
    %c0_i32_1 = arith.constant 0 : i32
    return %c0_i32, %c0_i32_0 : i32, i32
  }
  func.func @transform_2(%arg0: i32) -> (i32, i32) {
    %c0_i32 = arith.constant 0 : i32
    %c0_i32_0 = arith.constant 0 : i32
    %c0_i32_1 = arith.constant 0 : i32
    return %c0_i32, %c0_i32_0 : i32, i32
  }
  func.func @transform_3(%arg0: i32) -> (i32, i32) {
    %c0_i32 = arith.constant 0 : i32
    %c0_i32_0 = arith.constant 0 : i32
    %c0_i32_1 = arith.constant 0 : i32
    return %c0_i32, %c0_i32_0 : i32, i32
  }
  func.func @transform_4(%arg0: i32) -> (i32, i32) {
    %c0_i32 = arith.constant 0 : i32
    %c0_i32_0 = arith.constant 0 : i32
    %c0_i32_1 = arith.constant 0 : i32
    return %c0_i32, %c0_i32_0 : i32, i32
  }
  func.func @transform_5(%arg0: i32) -> (i32, i32) {
    %c0_i32 = arith.constant 0 : i32
    %c0_i32_0 = arith.constant 0 : i32
    %c0_i32_1 = arith.constant 0 : i32
    return %c0_i32, %c0_i32_0 : i32, i32
  }
  func.func @transform_6(%arg0: i32) -> i32 {
    %c0_i32 = arith.constant 0 : i32
    %c0_i32_0 = arith.constant 0 : i32
    return %c0_i32 : i32
  }
  func.func @transform_7(%arg0: i32) -> (i32, i32, i32) {
    %c0_i32 = arith.constant 0 : i32
    %c0_i32_0 = arith.constant 0 : i32
    %c0_i32_1 = arith.constant 0 : i32
    return %arg0, %c0_i32, %c0_i32_0 : i32, i32, i32
  }
}

</mosaic_0001>

<llo_original>
// kernel: mlp_forward.1
$region0: #{mlp_forward.1}
  #allocation0 [shape = 'u32[]', space=smem, size = 0x4, offset = 0x4, fixed_abs, tag = 'smem constant byte address 0x4 - core index']
  #allocation1 [shape = 'u32[144,128]{1,0:T(1,128)}', space=vmem, size = 0x12000, scoped, tag = 'internal scratch']
  #allocation2 [shape = 'f32[1]{0:T(128)S(6)}', space=smem, size = 0x200, scoped, tag = 'scoped memory for mlp_forward.1']
  %s0 = inlined_call_operand.vmem [shape: f32[128,7], index: 0, kind: input, shape index: {}]
  %s1 = inlined_call_operand.vmem [shape: f32[7,64], index: 1, kind: input, shape index: {}]
  %s2 = inlined_call_operand.vmem [shape: f32[1,64], index: 2, kind: input, shape index: {}]
  %s3 = inlined_call_operand.vmem [shape: f32[64,32], index: 3, kind: input, shape index: {}]
  %s4 = inlined_call_operand.vmem [shape: f32[1,32], index: 4, kind: input, shape index: {}]
  %s5 = inlined_call_operand.vmem [shape: f32[1,32], index: 5, kind: input, shape index: {}]
  %s6 = inlined_call_operand.<no memory space> [shape: f32[1], index: 6, kind: input, shape index: {}]
  %s7 = inlined_call_operand.vmem [shape: f32[1,1,128], index: 7, kind: output, shape index: {}]
  %s8 = sld [smem:[#allocation0]]
  $region38: #{mlp_forward.1} parent=0
    _
  %s10 = ssub.s32 1, %s8
  %s11 = scalar_select 0, %s10, %s8
  %12 = sst [smem:[#allocation2]] %s6
  // Predicated region
  $region2: #{mlp_forward.1} parent=0 // pred_check
    _
  $region3: #{mlp_forward.1} parent=0 // pred_check_branch
    %14 = sbr.rel (0) target = $region5
  $region4: #{mlp_forward.1} parent=0 // pred_region
    _
  $region5: #{mlp_forward.1} parent=0 // pred_fallthru
    _
  // Predicated region
  $region6: #{mlp_forward.1} parent=0 // pred_check
    _
  $region7: #{mlp_forward.1} parent=0 // pred_check_branch
    %16 = sbr.rel (0) target = $region9
  $region8: #{mlp_forward.1} parent=0 // pred_region
    _
  $region9: #{mlp_forward.1} parent=0 // pred_fallthru
    _
  // Predicated region
  $region10: #{mlp_forward.1} parent=0 // pred_check
    _
  $region11: #{mlp_forward.1} parent=0 // pred_check_branch
    %18 = sbr.rel (0) target = $region13
  $region12: #{mlp_forward.1} parent=0 // pred_region
    _
  $region13: #{mlp_forward.1} parent=0 // pred_fallthru
    _
  // Predicated region
  $region14: #{mlp_forward.1} parent=0 // pred_check
    _
  $region15: #{mlp_forward.1} parent=0 // pred_check_branch
    %20 = sbr.rel (0) target = $region17
  $region16: #{mlp_forward.1} parent=0 // pred_region
    _
  $region17: #{mlp_forward.1} parent=0 // pred_fallthru
    _
  // Predicated region
  $region18: #{mlp_forward.1} parent=0 // pred_check
    _
  $region19: #{mlp_forward.1} parent=0 // pred_check_branch
    %22 = sbr.rel (0) target = $region21
  $region20: #{mlp_forward.1} parent=0 // pred_region
    _
  $region21: #{mlp_forward.1} parent=0 // pred_fallthru
    _
  // Predicated region
  $region22: #{mlp_forward.1} parent=0 // pred_check
    _
  $region23: #{mlp_forward.1} parent=0 // pred_check_branch
    %24 = sbr.rel (0) target = $region25
  $region24: #{mlp_forward.1} parent=0 // pred_region
    _
  $region25: #{mlp_forward.1} parent=0 // pred_fallthru
    _
  // Predicated region
  $region26: #{mlp_forward.1} parent=0 // pred_check
    _
  $region27: #{mlp_forward.1} parent=0 // pred_check_branch
    %26 = sbr.rel (0) target = $region29
  $region28: #{mlp_forward.1} parent=0 // pred_region
    _
  $region29: #{mlp_forward.1} parent=0 // pred_fallthru
    _
  %v27 = vld [vmem:[%s0] sm:$0xff]
  %v28 = vld [vmem:[%s0 + $0x8] sm:$0xff]
  %v29 = vld [vmem:[%s0 + $0x10] sm:$0xff]
  %v30 = vld [vmem:[%s0 + $0x18] sm:$0xff]
  %v31 = vld [vmem:[%s0 + $0x20] sm:$0xff]
  %v32 = vld [vmem:[%s0 + $0x28] sm:$0xff]
  %v33 = vld [vmem:[%s0 + $0x30] sm:$0xff]
  %v34 = vld [vmem:[%s0 + $0x38] sm:$0xff]
  %v35 = vld [vmem:[%s0 + $0x40] sm:$0xff]
  %v36 = vld [vmem:[%s0 + $0x48] sm:$0xff]
  %v37 = vld [vmem:[%s0 + $0x50] sm:$0xff]
  %v38 = vld [vmem:[%s0 + $0x58] sm:$0xff]
  %v39 = vld [vmem:[%s0 + $0x60] sm:$0xff]
  %v40 = vld [vmem:[%s0 + $0x68] sm:$0xff]
  %v41 = vld [vmem:[%s0 + $0x70] sm:$0xff]
  %v42 = vld [vmem:[%s0 + $0x78] sm:$0xff]
  %v43 = vld [vmem:[%s1] sm:$0x7f]
  %v44 = vld [vmem:[%s2] sm:$0x1]
  %v46 = vlaneseq
  %v47 = vshrl.u32 %v46, 7
  %v48 = vsub.s32 0, %v47
  %v49 = vrot.slane %v44, %v48
  %vm51 = vcmask 56320
  %v53 = vsel %vm51, %v27, 0
  %v56 = vsel %vm51, %v28, 0
  %v59 = vsel %vm51, %v29, 0
  %v62 = vsel %vm51, %v30, 0
  %v65 = vsel %vm51, %v31, 0
  %v68 = vsel %vm51, %v32, 0
  %v71 = vsel %vm51, %v33, 0
  %v74 = vsel %vm51, %v34, 0
  %v77 = vsel %vm51, %v35, 0
  %v80 = vsel %vm51, %v36, 0
  %v83 = vsel %vm51, %v37, 0
  %v86 = vsel %vm51, %v38, 0
  %v89 = vsel %vm51, %v39, 0
  %v92 = vsel %vm51, %v40, 0
  %v95 = vsel %vm51, %v41, 0
  %v98 = vsel %vm51, %v42, 0
  %vm100 = vcmask 1046528
  %v102 = vsel %vm100, %v43, 0
  %104 = vmatprep.subr.mxu0 0.0
  %105 = vmatpush1.msra.mxu0 %v102
  %106 = vmatprep.subr.mxu0 0.0
  %107 = vmatpush1.msra.mxu0 0.0
  %108 = vmatprep.subr.mxu0 0.0
  %109 = vmatpush1.msra.mxu0 0.0
  %110 = vmatprep.subr.mxu0 0.0
  %111 = vmatpush1.msra.mxu0 0.0
  %112 = vmatprep.subr.mxu0 0.0
  %113 = vmatpush1.msra.mxu0 0.0
  %114 = vmatprep.subr.mxu0 0.0
  %115 = vmatpush1.msra.mxu0 0.0
  %116 = vmatprep.subr.mxu0 0.0
  %117 = vmatpush1.msra.mxu0 0.0
  %118 = vmatprep.subr.mxu0 0.0
  %119 = vmatpush1.msra.mxu0 0.0
  %120 = vmatprep.subr.mxu0 0.0
  %121 = vmatpush1.msra.mxu0 0.0
  %122 = vmatprep.subr.mxu0 0.0
  %123 = vmatpush1.msra.mxu0 0.0
  %124 = vmatprep.subr.mxu0 0.0
  %125 = vmatpush1.msra.mxu0 0.0
  %126 = vmatprep.subr.mxu0 0.0
  %127 = vmatpush1.msra.mxu0 0.0
  %128 = vmatprep.subr.mxu0 0.0
  %129 = vmatpush1.msra.mxu0 0.0
  %130 = vmatprep.subr.mxu0 0.0
  %131 = vmatpush1.msra.mxu0 0.0
  %132 = vmatprep.subr.mxu0 0.0
  %133 = vmatpush1.msra.mxu0 0.0
  %134 = vmatprep.subr.mxu0 0.0
  %135 = vmatpush1.msra.mxu0 0.0
  %136 = vmatprep.subr.mxu0 0.0
  %137 = vmatpush1.msra.mxu0 0.0
  %138 = vmatprep.subr.mxu0 0.0
  %139 = vmatpush1.msra.mxu0 0.0
  %140 = vmatprep.subr.mxu0 0.0
  %141 = vmatpush1.msra.mxu0 0.0
  %142 = vmatprep.subr.mxu0 0.0
  %143 = vmatpush1.msra.mxu0 0.0
  %144 = vmatprep.subr.mxu0 0.0
  %145 = vmatpush1.msra.mxu0 0.0
  %146 = vmatprep.subr.mxu0 0.0
  %147 = vmatpush1.msra.mxu0 0.0
  %148 = vmatprep.subr.mxu0 0.0
  %149 = vmatpush1.msra.mxu0 0.0
  %150 = vmatprep.subr.mxu0 0.0
  %151 = vmatpush1.msra.mxu0 0.0
  %152 = vmatprep.subr.mxu0 0.0
  %153 = vmatpush1.msra.mxu0 0.0
  %154 = vmatprep.subr.mxu0 0.0
  %155 = vmatpush1.msra.mxu0 0.0
  %156 = vmatprep.subr.mxu0 0.0
  %157 = vmatpush1.msra.mxu0 0.0
  %158 = vmatprep.subr.mxu0 0.0
  %159 = vmatpush1.msra.mxu0 0.0
  %160 = vmatprep.subr.mxu0 0.0
  %161 = vmatpush1.msra.mxu0 0.0
  %162 = vmatprep.subr.mxu0 0.0
  %163 = vmatpush1.msra.mxu0 0.0
  %164 = vmatprep.subr.mxu0 0.0
  %165 = vmatpush1.msra.mxu0 0.0
  %166 = vmatprep.subr.mxu0 0.0
  %167 = vmatpush1.msra.mxu0 0.0
  %168 = vmatprep.mubr.f32.mxu0 0.0
  %169 = vmatmul.mubr.f32.gmra.mrb[0].mxu0 %v53
  %v170 = vpop.f32.mrb[0].mxu0
  %v171 = vadd.f32 %v49, %v170
  %v172 = vpop.f32.mrb[0].mxu0
  %173 = vmatprep.mubr.f32.mxu0 0.0
  %174 = vmatmul.mubr.f32.gmra.mrb[0].mxu0 %v56
  %v175 = vpop.f32.mrb[0].mxu0
  %v176 = vadd.f32 %v49, %v175
  %v177 = vpop.f32.mrb[0].mxu0
  %178 = vmatprep.mubr.f32.mxu0 0.0
  %179 = vmatmul.mubr.f32.gmra.mrb[0].mxu0 %v59
  %v180 = vpop.f32.mrb[0].mxu0
  %v181 = vadd.f32 %v49, %v180
  %v182 = vpop.f32.mrb[0].mxu0
  %183 = vmatprep.mubr.f32.mxu0 0.0
  %184 = vmatmul.mubr.f32.gmra.mrb[0].mxu0 %v62
  %v185 = vpop.f32.mrb[0].mxu0
  %v186 = vadd.f32 %v49, %v185
  %v187 = vpop.f32.mrb[0].mxu0
  %188 = vmatprep.mubr.f32.mxu0 0.0
  %189 = vmatmul.mubr.f32.gmra.mrb[0].mxu0 %v65
  %v190 = vpop.f32.mrb[0].mxu0
  %v191 = vadd.f32 %v49, %v190
  %v192 = vpop.f32.mrb[0].mxu0
  %193 = vmatprep.mubr.f32.mxu0 0.0
  %194 = vmatmul.mubr.f32.gmra.mrb[0].mxu0 %v68
  %v195 = vpop.f32.mrb[0].mxu0
  %v196 = vadd.f32 %v49, %v195
  %v197 = vpop.f32.mrb[0].mxu0
  %198 = vmatprep.mubr.f32.mxu0 0.0
  %199 = vmatmul.mubr.f32.gmra.mrb[0].mxu0 %v71
  %v200 = vpop.f32.mrb[0].mxu0
  %v201 = vadd.f32 %v49, %v200
  %v202 = vpop.f32.mrb[0].mxu0
  %203 = vmatprep.mubr.f32.mxu0 0.0
  %204 = vmatmul.mubr.f32.gmra.mrb[0].mxu0 %v74
  %v205 = vpop.f32.mrb[0].mxu0
  %v206 = vadd.f32 %v49, %v205
  %v207 = vpop.f32.mrb[0].mxu0
  %208 = vmatprep.mubr.f32.mxu0 0.0
  %209 = vmatmul.mubr.f32.gmra.mrb[0].mxu0 %v77
  %v210 = vpop.f32.mrb[0].mxu0
  %v211 = vadd.f32 %v49, %v210
  %v212 = vpop.f32.mrb[0].mxu0
  %213 = vmatprep.mubr.f32.mxu0 0.0
  %214 = vmatmul.mubr.f32.gmra.mrb[0].mxu0 %v80
  %v215 = vpop.f32.mrb[0].mxu0
  %v216 = vadd.f32 %v49, %v215
  %v217 = vpop.f32.mrb[0].mxu0
  %218 = vmatprep.mubr.f32.mxu0 0.0
  %219 = vmatmul.mubr.f32.gmra.mrb[0].mxu0 %v83
  %v220 = vpop.f32.mrb[0].mxu0
  %v221 = vadd.f32 %v49, %v220
  %v222 = vpop.f32.mrb[0].mxu0
  %223 = vmatprep.mubr.f32.mxu0 0.0
  %224 = vmatmul.mubr.f32.gmra.mrb[0].mxu0 %v86
  %v225 = vpop.f32.mrb[0].mxu0
  %v226 = vadd.f32 %v49, %v225
  %v227 = vpop.f32.mrb[0].mxu0
  %228 = vmatprep.mubr.f32.mxu0 0.0
  %229 = vmatmul.mubr.f32.gmra.mrb[0].mxu0 %v89
  %v230 = vpop.f32.mrb[0].mxu0
  %v231 = vadd.f32 %v49, %v230
  %v232 = vpop.f32.mrb[0].mxu0
  %233 = vmatprep.mubr.f32.mxu0 0.0
  %234 = vmatmul.mubr.f32.gmra.mrb[0].mxu0 %v92
  %v235 = vpop.f32.mrb[0].mxu0
  %v236 = vadd.f32 %v49, %v235
  %v237 = vpop.f32.mrb[0].mxu0
  %238 = vmatprep.mubr.f32.mxu0 0.0
  %239 = vmatmul.mubr.f32.gmra.mrb[0].mxu0 %v95
  %v240 = vpop.f32.mrb[0].mxu0
  %v241 = vadd.f32 %v49, %v240
  %v242 = vpop.f32.mrb[0].mxu0
  %243 = vmatprep.mubr.f32.mxu0 0.0
  %244 = vmatmul.mubr.f32.gmra.mrb[0].mxu0 %v98
  %v245 = vpop.f32.mrb[0].mxu0
  %v246 = vadd.f32 %v49, %v245
  %v247 = vpop.f32.mrb[0].mxu0
  %248 = vdwg.mxu0
  %v249 = vmax.f32 %v171, 0.0
  %v250 = vmax.f32 %v176, 0.0
  %v251 = vmax.f32 %v181, 0.0
  %v252 = vmax.f32 %v186, 0.0
  %v253 = vmax.f32 %v191, 0.0
  %v254 = vmax.f32 %v196, 0.0
  %v255 = vmax.f32 %v201, 0.0
  %v256 = vmax.f32 %v206, 0.0
  %v257 = vmax.f32 %v211, 0.0
  %v258 = vmax.f32 %v216, 0.0
  %v259 = vmax.f32 %v221, 0.0
  %v260 = vmax.f32 %v226, 0.0
  %v261 = vmax.f32 %v231, 0.0
  %v262 = vmax.f32 %v236, 0.0
  %v263 = vmax.f32 %v241, 0.0
  %v264 = vmax.f32 %v246, 0.0
  %v265 = vld [vmem:[%s3] sm:$0xff]
  %v266 = vld [vmem:[%s3 + $0x8] sm:$0xff]
  %v267 = vld [vmem:[%s3 + $0x10] sm:$0xff]
  %v268 = vld [vmem:[%s3 + $0x18] sm:$0xff]
  %v269 = vld [vmem:[%s3 + $0x20] sm:$0xff]
  %v270 = vld [vmem:[%s3 + $0x28] sm:$0xff]
  %v271 = vld [vmem:[%s3 + $0x30] sm:$0xff]
  %v272 = vld [vmem:[%s3 + $0x38] sm:$0xff]
  %v273 = vld [vmem:[%s4] sm:$0x1]
  %v275 = vlaneseq
  %v276 = vshrl.u32 %v275, 7
  %v277 = vsub.s32 0, %v276
  %v278 = vrot.slane %v273, %v277
  %vm280 = vcmask 523264
  %v282 = vsel %vm280, %v249, 0
  %v285 = vsel %vm280, %v250, 0
  %v288 = vsel %vm280, %v251, 0
  %v291 = vsel %vm280, %v252, 0
  %v294 = vsel %vm280, %v253, 0
  %v297 = vsel %vm280, %v254, 0
  %v300 = vsel %vm280, %v255, 0
  %v303 = vsel %vm280, %v256, 0
  %v306 = vsel %vm280, %v257, 0
  %v309 = vsel %vm280, %v258, 0
  %v312 = vsel %vm280, %v259, 0
  %v315 = vsel %vm280, %v260, 0
  %v318 = vsel %vm280, %v261, 0
  %v321 = vsel %vm280, %v262, 0
  %v324 = vsel %vm280, %v263, 0
  %v327 = vsel %vm280, %v264, 0
  %329 = vmatprep.subr.mxu0 0.0
  %330 = vmatpush1.msra.mxu0 %v265
  %331 = vmatprep.subr.mxu0 0.0
  %332 = vmatpush1.msra.mxu0 %v266
  %333 = vmatprep.subr.mxu0 0.0
  %334 = vmatpush1.msra.mxu0 %v267
  %335 = vmatprep.subr.mxu0 0.0
  %336 = vmatpush1.msra.mxu0 %v268
  %337 = vmatprep.subr.mxu0 0.0
  %338 = vmatpush1.msra.mxu0 %v269
  %339 = vmatprep.subr.mxu0 0.0
  %340 = vmatpush1.msra.mxu0 %v270
  %341 = vmatprep.subr.mxu0 0.0
  %342 = vmatpush1.msra.mxu0 %v271
  %343 = vmatprep.subr.mxu0 0.0
  %344 = vmatpush1.msra.mxu0 %v272
  %345 = vmatprep.subr.mxu0 0.0
  %346 = vmatpush1.msra.mxu0 0.0
  %347 = vmatprep.subr.mxu0 0.0
  %348 = vmatpush1.msra.mxu0 0.0
  %349 = vmatprep.subr.mxu0 0.0
  %350 = vmatpush1.msra.mxu0 0.0
  %351 = vmatprep.subr.mxu0 0.0
  %352 = vmatpush1.msra.mxu0 0.0
  %353 = vmatprep.subr.mxu0 0.0
  %354 = vmatpush1.msra.mxu0 0.0
  %355 = vmatprep.subr.mxu0 0.0
  %356 = vmatpush1.msra.mxu0 0.0
  %357 = vmatprep.subr.mxu0 0.0
  %358 = vmatpush1.msra.mxu0 0.0
  %359 = vmatprep.subr.mxu0 0.0
  %360 = vmatpush1.msra.mxu0 0.0
  %361 = vmatprep.subr.mxu0 0.0
  %362 = vmatpush1.msra.mxu0 0.0
  %363 = vmatprep.subr.mxu0 0.0
  %364 = vmatpush1.msra.mxu0 0.0
  %365 = vmatprep.subr.mxu0 0.0
  %366 = vmatpush1.msra.mxu0 0.0
  %367 = vmatprep.subr.mxu0 0.0
  %368 = vmatpush1.msra.mxu0 0.0
  %369 = vmatprep.subr.mxu0 0.0
  %370 = vmatpush1.msra.mxu0 0.0
  %371 = vmatprep.subr.mxu0 0.0
  %372 = vmatpush1.msra.mxu0 0.0
  %373 = vmatprep.subr.mxu0 0.0
  %374 = vmatpush1.msra.mxu0 0.0
  %375 = vmatprep.subr.mxu0 0.0
  %376 = vmatpush1.msra.mxu0 0.0
  %377 = vmatprep.subr.mxu0 0.0
  %378 = vmatpush1.msra.mxu0 0.0
  %379 = vmatprep.subr.mxu0 0.0
  %380 = vmatpush1.msra.mxu0 0.0
  %381 = vmatprep.subr.mxu0 0.0
  %382 = vmatpush1.msra.mxu0 0.0
  %383 = vmatprep.subr.mxu0 0.0
  %384 = vmatpush1.msra.mxu0 0.0
  %385 = vmatprep.subr.mxu0 0.0
  %386 = vmatpush1.msra.mxu0 0.0
  %387 = vmatprep.subr.mxu0 0.0
  %388 = vmatpush1.msra.mxu0 0.0
  %389 = vmatprep.subr.mxu0 0.0
  %390 = vmatpush1.msra.mxu0 0.0
  %391 = vmatprep.subr.mxu0 0.0
  %392 = vmatpush1.msra.mxu0 0.0
  %393 = vmatprep.mubr.f32.mxu0 0.0
  %394 = vmatmul.mubr.f32.gmra.mrb[0].mxu0 %v282
  %v395 = vpop.f32.mrb[0].mxu0
  %v396 = vadd.f32 %v278, %v395
  %v397 = vpop.f32.mrb[0].mxu0
  %398 = vmatprep.mubr.f32.mxu0 0.0
  %399 = vmatmul.mubr.f32.gmra.mrb[0].mxu0 %v285
  %v400 = vpop.f32.mrb[0].mxu0
  %v401 = vadd.f32 %v278, %v400
  %v402 = vpop.f32.mrb[0].mxu0
  %403 = vmatprep.mubr.f32.mxu0 0.0
  %404 = vmatmul.mubr.f32.gmra.mrb[0].mxu0 %v288
  %v405 = vpop.f32.mrb[0].mxu0
  %v406 = vadd.f32 %v278, %v405
  %v407 = vpop.f32.mrb[0].mxu0
  %408 = vmatprep.mubr.f32.mxu0 0.0
  %409 = vmatmul.mubr.f32.gmra.mrb[0].mxu0 %v291
  %v410 = vpop.f32.mrb[0].mxu0
  %v411 = vadd.f32 %v278, %v410
  %v412 = vpop.f32.mrb[0].mxu0
  %413 = vmatprep.mubr.f32.mxu0 0.0
  %414 = vmatmul.mubr.f32.gmra.mrb[0].mxu0 %v294
  %v415 = vpop.f32.mrb[0].mxu0
  %v416 = vadd.f32 %v278, %v415
  %v417 = vpop.f32.mrb[0].mxu0
  %418 = vmatprep.mubr.f32.mxu0 0.0
  %419 = vmatmul.mubr.f32.gmra.mrb[0].mxu0 %v297
  %v420 = vpop.f32.mrb[0].mxu0
  %v421 = vadd.f32 %v278, %v420
  %v422 = vpop.f32.mrb[0].mxu0
  %423 = vmatprep.mubr.f32.mxu0 0.0
  %424 = vmatmul.mubr.f32.gmra.mrb[0].mxu0 %v300
  %v425 = vpop.f32.mrb[0].mxu0
  %v426 = vadd.f32 %v278, %v425
  %v427 = vpop.f32.mrb[0].mxu0
  %428 = vmatprep.mubr.f32.mxu0 0.0
  %429 = vmatmul.mubr.f32.gmra.mrb[0].mxu0 %v303
  %v430 = vpop.f32.mrb[0].mxu0
  %v431 = vadd.f32 %v278, %v430
  %v432 = vpop.f32.mrb[0].mxu0
  %433 = vmatprep.mubr.f32.mxu0 0.0
  %434 = vmatmul.mubr.f32.gmra.mrb[0].mxu0 %v306
  %v435 = vpop.f32.mrb[0].mxu0
  %v436 = vadd.f32 %v278, %v435
  %v437 = vpop.f32.mrb[0].mxu0
  %438 = vmatprep.mubr.f32.mxu0 0.0
  %439 = vmatmul.mubr.f32.gmra.mrb[0].mxu0 %v309
  %v440 = vpop.f32.mrb[0].mxu0
  %v441 = vadd.f32 %v278, %v440
  %v442 = vpop.f32.mrb[0].mxu0
  %443 = vmatprep.mubr.f32.mxu0 0.0
  %444 = vmatmul.mubr.f32.gmra.mrb[0].mxu0 %v312
  %v445 = vpop.f32.mrb[0].mxu0
  %v446 = vadd.f32 %v278, %v445
  %v447 = vpop.f32.mrb[0].mxu0
  %448 = vmatprep.mubr.f32.mxu0 0.0
  %449 = vmatmul.mubr.f32.gmra.mrb[0].mxu0 %v315
  %v450 = vpop.f32.mrb[0].mxu0
  %v451 = vadd.f32 %v278, %v450
  %v452 = vpop.f32.mrb[0].mxu0
  %453 = vmatprep.mubr.f32.mxu0 0.0
  %454 = vmatmul.mubr.f32.gmra.mrb[0].mxu0 %v318
  %v455 = vpop.f32.mrb[0].mxu0
  %v456 = vadd.f32 %v278, %v455
  %v457 = vpop.f32.mrb[0].mxu0
  %458 = vmatprep.mubr.f32.mxu0 0.0
  %459 = vmatmul.mubr.f32.gmra.mrb[0].mxu0 %v321
  %v460 = vpop.f32.mrb[0].mxu0
  %v461 = vadd.f32 %v278, %v460
  %v462 = vpop.f32.mrb[0].mxu0
  %463 = vmatprep.mubr.f32.mxu0 0.0
  %464 = vmatmul.mubr.f32.gmra.mrb[0].mxu0 %v324
  %v465 = vpop.f32.mrb[0].mxu0
  %v466 = vadd.f32 %v278, %v465
  %v467 = vpop.f32.mrb[0].mxu0
  %468 = vmatprep.mubr.f32.mxu0 0.0
  %469 = vmatmul.mubr.f32.gmra.mrb[0].mxu0 %v327
  %v470 = vpop.f32.mrb[0].mxu0
  %v471 = vadd.f32 %v278, %v470
  %v472 = vpop.f32.mrb[0].mxu0
  %473 = vdwg.mxu0
  %v474 = vmax.f32 %v396, 0.0
  %v475 = vmax.f32 %v401, 0.0
  %v476 = vmax.f32 %v406, 0.0
  %v477 = vmax.f32 %v411, 0.0
  %v478 = vmax.f32 %v416, 0.0
  %v479 = vmax.f32 %v421, 0.0
  %v480 = vmax.f32 %v426, 0.0
  %v481 = vmax.f32 %v431, 0.0
  %v482 = vmax.f32 %v436, 0.0
  %v483 = vmax.f32 %v441, 0.0
  %v484 = vmax.f32 %v446, 0.0
  %v485 = vmax.f32 %v451, 0.0
  %v486 = vmax.f32 %v456, 0.0
  %v487 = vmax.f32 %v461, 0.0
  %v488 = vmax.f32 %v466, 0.0
  %v489 = vmax.f32 %v471, 0.0
  %v490 = vld [vmem:[%s5] sm:$0x1]
  %v492 = vlaneseq
  %v493 = vshrl.u32 %v492, 7
  %v494 = vsub.s32 0, %v493
  %v495 = vrot.slane %v490, %v494
  %v497 = vmul.f32 %v474, %v495
  %v498 = vmul.f32 %v475, %v495
  %v499 = vmul.f32 %v476, %v495
  %v500 = vmul.f32 %v477, %v495
  %v501 = vmul.f32 %v478, %v495
  %v502 = vmul.f32 %v479, %v495
  %v503 = vmul.f32 %v480, %v495
  %v504 = vmul.f32 %v481, %v495
  %v505 = vmul.f32 %v482, %v495
  %v506 = vmul.f32 %v483, %v495
  %v507 = vmul.f32 %v484, %v495
  %v508 = vmul.f32 %v485, %v495
  %v509 = vmul.f32 %v486, %v495
  %v510 = vmul.f32 %v487, %v495
  %v511 = vmul.f32 %v488, %v495
  %v512 = vmul.f32 %v489, %v495
  %vm513 = vcmask 261120
  %v514 = vsel %vm513, %v497, 0.0
  %515 = vadd.xlane.f32.xlu0 %v514
  %v516 = vpop.xlane.xlu0 %515
  %v517 = vsel %vm513, %v498, 0.0
  %518 = vadd.xlane.f32.xlu0 %v517
  %v519 = vpop.xlane.xlu0 %518
  %v520 = vsel %vm513, %v499, 0.0
  %521 = vadd.xlane.f32.xlu0 %v520
  %v522 = vpop.xlane.xlu0 %521
  %v523 = vsel %vm513, %v500, 0.0
  %524 = vadd.xlane.f32.xlu0 %v523
  %v525 = vpop.xlane.xlu0 %524
  %v526 = vsel %vm513, %v501, 0.0
  %527 = vadd.xlane.f32.xlu0 %v526
  %v528 = vpop.xlane.xlu0 %527
  %v529 = vsel %vm513, %v502, 0.0
  %530 = vadd.xlane.f32.xlu0 %v529
  %v531 = vpop.xlane.xlu0 %530
  %v532 = vsel %vm513, %v503, 0.0
  %533 = vadd.xlane.f32.xlu0 %v532
  %v534 = vpop.xlane.xlu0 %533
  %v535 = vsel %vm513, %v504, 0.0
  %536 = vadd.xlane.f32.xlu0 %v535
  %v537 = vpop.xlane.xlu0 %536
  %v538 = vsel %vm513, %v505, 0.0
  %539 = vadd.xlane.f32.xlu0 %v538
  %v540 = vpop.xlane.xlu0 %539
  %v541 = vsel %vm513, %v506, 0.0
  %542 = vadd.xlane.f32.xlu0 %v541
  %v543 = vpop.xlane.xlu0 %542
  %v544 = vsel %vm513, %v507, 0.0
  %545 = vadd.xlane.f32.xlu0 %v544
  %v546 = vpop.xlane.xlu0 %545
  %v547 = vsel %vm513, %v508, 0.0
  %548 = vadd.xlane.f32.xlu0 %v547
  %v549 = vpop.xlane.xlu0 %548
  %v550 = vsel %vm513, %v509, 0.0
  %551 = vadd.xlane.f32.xlu0 %v550
  %v552 = vpop.xlane.xlu0 %551
  %v553 = vsel %vm513, %v510, 0.0
  %554 = vadd.xlane.f32.xlu0 %v553
  %v555 = vpop.xlane.xlu0 %554
  %v556 = vsel %vm513, %v511, 0.0
  %557 = vadd.xlane.f32.xlu0 %v556
  %v558 = vpop.xlane.xlu0 %557
  %v559 = vsel %vm513, %v512, 0.0
  %560 = vadd.xlane.f32.xlu0 %v559
  %v561 = vpop.xlane.xlu0 %560
  %s562 = sld [smem:[#allocation2]]
  %v563 = vstv %s562
  %v564 = vadd.f32 %v516, %v563
  %v565 = vadd.f32 %v519, %v563
  %v566 = vadd.f32 %v522, %v563
  %v567 = vadd.f32 %v525, %v563
  %v568 = vadd.f32 %v528, %v563
  %v569 = vadd.f32 %v531, %v563
  %v570 = vadd.f32 %v534, %v563
  %v571 = vadd.f32 %v537, %v563
  %v572 = vadd.f32 %v540, %v563
  %v573 = vadd.f32 %v543, %v563
  %v574 = vadd.f32 %v546, %v563
  %v575 = vadd.f32 %v549, %v563
  %v576 = vadd.f32 %v552, %v563
  %v577 = vadd.f32 %v555, %v563
  %v578 = vadd.f32 %v558, %v563
  %v579 = vadd.f32 %v561, %v563
  %v596 = vlaneseq
  %v597 = vand.u32 %v596, 127
  %v598 = vlaneseq
  %v599 = vshrl.u32 %v598, 7
  %v600 = vsub.s32 %v597, %v599
  %v601 = vrot.slane %v564, %v600
  %v602 = vadd.s32 %v597, 4294967288
  %v603 = vlaneseq
  %v604 = vshrl.u32 %v603, 7
  %v605 = vsub.s32 %v602, %v604
  %v606 = vrot.slane %v565, %v605
  %vm607 = vcmask 130112
  %v608 = vsel %vm607, %v606, %v601
  %v609 = vadd.s32 %v597, 4294967280
  %v610 = vlaneseq
  %v611 = vshrl.u32 %v610, 7
  %v612 = vsub.s32 %v609, %v611
  %v613 = vrot.slane %v566, %v612
  %vm614 = vcmask 195712
  %v615 = vsel %vm614, %v613, %v608
  %v616 = vadd.s32 %v597, 4294967272
  %v617 = vlaneseq
  %v618 = vshrl.u32 %v617, 7
  %v619 = vsub.s32 %v616, %v618
  %v620 = vrot.slane %v567, %v619
  %vm621 = vcmask 261312
  %v622 = vsel %vm621, %v620, %v615
  %v623 = vadd.s32 %v597, 4294967264
  %v624 = vlaneseq
  %v625 = vshrl.u32 %v624, 7
  %v626 = vsub.s32 %v623, %v625
  %v627 = vrot.slane %v568, %v626
  %vm628 = vcmask 326912
  %v629 = vsel %vm628, %v627, %v622
  %v630 = vadd.s32 %v597, 4294967256
  %v631 = vlaneseq
  %v632 = vshrl.u32 %v631, 7
  %v633 = vsub.s32 %v630, %v632
  %v634 = vrot.slane %v569, %v633
  %vm635 = vcmask 392512
  %v636 = vsel %vm635, %v634, %v629
  %v637 = vadd.s32 %v597, 4294967248
  %v638 = vlaneseq
  %v639 = vshrl.u32 %v638, 7
  %v640 = vsub.s32 %v637, %v639
  %v641 = vrot.slane %v570, %v640
  %vm642 = vcmask 458112
  %v643 = vsel %vm642, %v641, %v636
  %v644 = vadd.s32 %v597, 4294967240
  %v645 = vlaneseq
  %v646 = vshrl.u32 %v645, 7
  %v647 = vsub.s32 %v644, %v646
  %v648 = vrot.slane %v571, %v647
  %vm649 = vcmask 523712
  %v650 = vsel %vm649, %v648, %v643
  %v651 = vadd.s32 %v597, 4294967232
  %v652 = vlaneseq
  %v653 = vshrl.u32 %v652, 7
  %v654 = vsub.s32 %v651, %v653
  %v655 = vrot.slane %v572, %v654
  %vm656 = vcmask 589312
  %v657 = vsel %vm656, %v655, %v650
  %v658 = vadd.s32 %v597, 4294967224
  %v659 = vlaneseq
  %v660 = vshrl.u32 %v659, 7
  %v661 = vsub.s32 %v658, %v660
  %v662 = vrot.slane %v573, %v661
  %vm663 = vcmask 654912
  %v664 = vsel %vm663, %v662, %v657
  %v665 = vadd.s32 %v597, 4294967216
  %v666 = vlaneseq
  %v667 = vshrl.u32 %v666, 7
  %v668 = vsub.s32 %v665, %v667
  %v669 = vrot.slane %v574, %v668
  %vm670 = vcmask 720512
  %v671 = vsel %vm670, %v669, %v664
  %v672 = vadd.s32 %v597, 4294967208
  %v673 = vlaneseq
  %v674 = vshrl.u32 %v673, 7
  %v675 = vsub.s32 %v672, %v674
  %v676 = vrot.slane %v575, %v675
  %vm677 = vcmask 786112
  %v678 = vsel %vm677, %v676, %v671
  %v679 = vadd.s32 %v597, 4294967200
  %v680 = vlaneseq
  %v681 = vshrl.u32 %v680, 7
  %v682 = vsub.s32 %v679, %v681
  %v683 = vrot.slane %v576, %v682
  %vm684 = vcmask 851712
  %v685 = vsel %vm684, %v683, %v678
  %v686 = vadd.s32 %v597, 4294967192
  %v687 = vlaneseq
  %v688 = vshrl.u32 %v687, 7
  %v689 = vsub.s32 %v686, %v688
  %v690 = vrot.slane %v577, %v689
  %vm691 = vcmask 917312
  %v692 = vsel %vm691, %v690, %v685
  %v693 = vadd.s32 %v597, 4294967184
  %v694 = vlaneseq
  %v695 = vshrl.u32 %v694, 7
  %v696 = vsub.s32 %v693, %v695
  %v697 = vrot.slane %v578, %v696
  %vm698 = vcmask 982912
  %v699 = vsel %vm698, %v697, %v692
  %v700 = vadd.s32 %v597, 4294967176
  %v701 = vlaneseq
  %v702 = vshrl.u32 %v701, 7
  %v703 = vsub.s32 %v700, %v702
  %v704 = vrot.slane %v579, %v703
  %vm705 = vcmask 1048512
  %v706 = vsel %vm705, %v704, %v699
  %708 = vst [vmem:[%s7] sm:$0x1] %v706
  // Predicated region
  $region30: #{mlp_forward.1} parent=0 // pred_check
    _
  $region31: #{mlp_forward.1} parent=0 // pred_check_branch
    %710 = sbr.rel (0) target = $region33
  $region32: #{mlp_forward.1} parent=0 // pred_region
    _
  $region33: #{mlp_forward.1} parent=0 // pred_fallthru
    _
  // Predicated region
  $region34: #{mlp_forward.1} parent=0 // pred_check
    _
  $region35: #{mlp_forward.1} parent=0 // pred_check_branch
    %712 = sbr.rel (0) target = $region37
  $region36: #{mlp_forward.1} parent=0 // pred_region
    _
  $region37: #{mlp_forward.1} parent=0 // pred_fallthru
    _

</llo_original>
